<compile_context>
chip_gen: v7x
topology: tpu7x:2x2x1
jax: 0.10.0
libtpu: 0.0.40
codegen_flags: <defaults>
</compile_context>

<pallas_src>
from functools import partial

import jax
import jax.numpy as jnp
from jax.experimental import pallas as pl
from jax.experimental.pallas import tpu as pltpu

LANES = 128          # TPU lane width: samples packed per view-row
GATES = 4            # r, z, n(input part), h0-passthrough


def _round_up(x, m):
    return ((x + m - 1) // m) * m


def _gru_module_kernel(x_ref, w_ref, s_ref, out_ref):
    """One row-tile of the fused GRU(hidden=1) step + Linear(1, 1).

    x_ref  : (rows, 128*F)  packed input view: lane j*F+f = feature f of in-group
                            sample j (f = 0 is the h0 column of the original slab)
    w_ref  : (128*F, 4*128) block-interleaved projection weight
    s_ref  : (8,) SMEM f32  [b_r, b_z, b_in_n, b_hn, w_hn, w_lin, b_lin, 0]
    out_ref: (rows, 128)    lane+sublane dense output slab
    """
    x = x_ref[...].astype(jnp.float32)          # cast after load (input may be bf16)

    # One natural-orientation MXU dot per tile: the 4 output groups of 128 lanes
    # are the r / z / n pre-activations and the h0 passthrough, each (rows, 128)
    # lane- and sublane-dense, so every downstream VPU/EUP op and the store are
    # full-vreg dense.
    t = jnp.dot(x, w_ref[...], preferred_element_type=jnp.float32)

    h = t[:, 3 * LANES:4 * LANES]                                   # initial hidden
    r = jax.nn.sigmoid(t[:, 0 * LANES:1 * LANES] + s_ref[0])        # reset gate
    z = jax.nn.sigmoid(t[:, 1 * LANES:2 * LANES] + s_ref[1])        # update gate
    n = jnp.tanh(t[:, 2 * LANES:3 * LANES] + s_ref[2]
                 + r * (h * s_ref[4] + s_ref[3]))                   # candidate
    h_new = (1.0 - z) * n + z * h

    out_ref[...] = h_new * s_ref[5] + s_ref[6]                      # Linear(1, 1)


def _pick_block_rows(n_rows, itemsize, feat):
    """View-rows per grid step: ~4 MiB of *real* input data per pipelined buffer,
    a multiple of 8 sublanes, and >=2 grid steps when there is enough data so both
    v7x TensorCores get work via dimension_semantics=('parallel',)."""
    budget = 4 * 1024 * 1024
    by_vmem = max(8, (budget // (LANES * feat * itemsize)) // 8 * 8)
    by_split = max(8, ((n_rows + 1) // 2) // 8 * 8)
    return int(min(by_vmem, by_split))


def init_params(key, input_size):
    """Deterministic parameter init matching the module's parameter shapes."""
    ks = jax.random.split(key, 6)
    stdv = 1.0  # GRU hidden_size = 1 -> 1/sqrt(1)
    w_ih = jax.random.uniform(ks[0], (3, input_size), jnp.float32, -stdv, stdv)
    w_hh = jax.random.uniform(ks[1], (3, 1), jnp.float32, -stdv, stdv)
    b_ih = jax.random.uniform(ks[2], (3,), jnp.float32, -stdv, stdv)
    b_hh = jax.random.uniform(ks[3], (3,), jnp.float32, -stdv, stdv)
    w_lin = jax.random.uniform(ks[4], (1, 1), jnp.float32, -1.0, 1.0)
    b_lin = jax.random.uniform(ks[5], (1,), jnp.float32, -1.0, 1.0)
    return dict(w_ih=w_ih, w_hh=w_hh, b_ih=b_ih, b_hh=b_hh,
                w_lin=w_lin, b_lin=b_lin)


@partial(jax.jit, static_argnames=("block_rows",))
def gru_module_forward(inputs, params, block_rows=None):
    """Pallas equivalent of GRUModule.forward. inputs: (B, n_actions, F)."""
    B, n_actions, F = inputs.shape
    N = B * n_actions

    # -- flatten + pack: keep original dtype, no astype / transpose HBM passes ----
    flat = inputs.reshape(N, F)
    # The packed (rows, 128*F) view needs N % 128 == 0.  Pad only to the next 128
    # samples (1024 for tiny inputs -> MXU sees >=8 sublanes); exact multiples of
    # 128 pass straight through with zero copies.
    row_mult = 8 * LANES if N < 8 * LANES else LANES
    n_pad = _round_up(N, row_mult)
    if n_pad != N:
        flat = jnp.pad(flat, ((0, n_pad - N), (0, 0)))
    n_rows = n_pad // LANES
    x_view = flat.reshape(n_rows, LANES * F)       # free row-major view

    # -- parameters ----------------------------------------------------------------
    w_ih = params["w_ih"]                          # (3, D), gate order r, z, n
    w_hh = params["w_hh"].reshape(3)               # (3,)
    b_ih = params["b_ih"]
    b_hh = params["b_hh"]
    w_lin = params["w_lin"].reshape(())
    b_lin = params["b_lin"].reshape(())

    # Per-gate coefficients over the packed feature vector [h0, x_0..x_{D-1}]:
    #   row 0: r gate (w_hh_r folded onto h0)   row 2: n gate input part
    #   row 1: z gate (w_hh_z folded onto h0)   row 3: h0 passthrough (e0)
    coeff = jnp.zeros((GATES, F), jnp.float32)
    coeff = coeff.at[0, 0].set(w_hh[0]).at[0, 1:].set(w_ih[0])
    coeff = coeff.at[1, 0].set(w_hh[1]).at[1, 1:].set(w_ih[1])
    coeff = coeff.at[2, 1:].set(w_ih[2])
    coeff = coeff.at[3, 0].set(1.0)

    # Block-interleaved projection: w_big[j*F + f, g*128 + j] = coeff[g, f]
    w_big = jnp.einsum("gf,jk->jfgk", coeff, jnp.eye(LANES, dtype=jnp.float32))
    w_big = w_big.reshape(LANES * F, GATES * LANES)

    scalars = jnp.stack([
        b_ih[0] + b_hh[0],        # folded r bias
        b_ih[1] + b_hh[1],        # folded z bias
        b_ih[2],                  # n input bias
        b_hh[2],                  # n hidden bias (inside r * (...))
        w_hh[2],                  # n hidden weight
        w_lin,                    # linear_out weight
        b_lin,                    # linear_out bias
        jnp.float32(0.0),
    ]).astype(jnp.float32)

    # -- launch ----------------------------------------------------------------
    if block_rows is None:
        block_rows = _pick_block_rows(n_rows, inputs.dtype.itemsize, F)
    grid = (pl.cdiv(n_rows, block_rows),)          # ragged tail handled by Pallas

    out = pl.pallas_call(
        _gru_module_kernel,
        out_shape=jax.ShapeDtypeStruct((n_rows, LANES), jnp.float32),
        grid=grid,
        in_specs=[
            pl.BlockSpec((block_rows, LANES * F), lambda i: (i, 0)),   # packed rows
            pl.BlockSpec((LANES * F, GATES * LANES), lambda i: (0, 0)),  # resident W
            pl.BlockSpec(memory_space=pltpu.MemorySpace.SMEM),         # scalar params
        ],
        out_specs=pl.BlockSpec((block_rows, LANES), lambda i: (i, 0)), # dense out
        compiler_params=pltpu.CompilerParams(
            dimension_semantics=("parallel",),      # v7x: shard rows across 2 TCs
            vmem_limit_bytes=48 * 1024 * 1024,      # ~13 MiB used; lifts v5e default
        ),
    )(x_view, w_big, scalars)

    # (rows, 128) -> (N, 1): free view when N % 128 == 0, tiny slice otherwise.
    return out.reshape(n_pad, 1)[:N].reshape(B, n_actions, 1)


def gru_module_reference(inputs, params):
    """Pure-JAX reference (same math as the PyTorch module)."""
    B, n_actions, F = inputs.shape
    flat = inputs.reshape(B * n_actions, F).astype(jnp.float32)
    x, h = flat[:, 1:], flat[:, :1]
    gi = x @ params["w_ih"].T + params["b_ih"][None, :]
    gh = h @ params["w_hh"].T + params["b_hh"][None, :]
    r = jax.nn.sigmoid(gi[:, 0:1] + gh[:, 0:1])
    z = jax.nn.sigmoid(gi[:, 1:2] + gh[:, 1:2])
    n = jnp.tanh(gi[:, 2:3] + r * gh[:, 2:3])
    h_new = (1.0 - z) * n + z * h
    out = h_new @ params["w_lin"].T + params["b_lin"][None, :]
    return out.reshape(B, n_actions, 1)


if __name__ == "__main__":
    key = jax.random.PRNGKey(0)
    k_in, k_par = jax.random.split(key)

    # GRUModule(input_size=7, hidden_size=<unused>, dropout=<unused>):
    # nn.GRU(input_size, 1) hard-codes hidden=1; forward expects last dim = input_size + 1.
    B, n_actions, input_size = 2, 4, 7
    inputs = jax.random.normal(k_in, (B, n_actions, input_size + 1), jnp.float32)
    params = init_params(k_par, input_size)

    out = gru_module_forward(inputs, params)
    jax.block_until_ready(out)

    ref = gru_module_reference(inputs, params)
    assert out.shape == (B, n_actions, 1)
    assert jnp.allclose(out, ref, atol=1e-5, rtol=1e-5)

    print("KERNEL_OK")
</pallas_src>

<mosaic_0001>
module attributes {stable_mosaic.version = 11 : i64} {
  func.func @_gru_module_kernel(%arg0: i32, %arg1: memref<8x1024xf32, #tpu.memory_space<vmem>>, %arg2: memref<1024x512xf32, #tpu.memory_space<vmem>>, %arg3: memref<8xf32, #tpu.memory_space<smem>>, %arg4: memref<8x128xf32, #tpu.memory_space<vmem>>) attributes {dimension_semantics = [#tpu.dimension_semantics<parallel>], iteration_bounds = array<i64: 1>, scalar_prefetch = 0 : i64, scratch_operands = 0 : i64, tpu.core_type = #tpu.core_type<tc>, window_params = [{transform_indices = @transform_0, window_bounds = array<i64: 8, 1024>}, {pipeline_mode = #tpu.pipeline_mode<synchronous>, transform_indices = @transform_1, window_bounds = array<i64: 1024, 512>}, {transform_indices = @transform_2, window_bounds = array<i64: 8>}, {transform_indices = @transform_3, window_bounds = array<i64: 8, 128>}]} {
    %c0 = arith.constant 0 : index
    %c0_0 = arith.constant 0 : index
    %0 = vector.load %arg1[%c0, %c0_0] : memref<8x1024xf32, #tpu.memory_space<vmem>>, vector<8x1024xf32>
    %c0_1 = arith.constant 0 : index
    %c0_2 = arith.constant 0 : index
    %1 = vector.load %arg2[%c0_1, %c0_2] : memref<1024x512xf32, #tpu.memory_space<vmem>>, vector<1024x512xf32>
    %cst = arith.constant dense<0.000000e+00> : vector<8x512xf32>
    %2 = tpu.matmul %0, %1, %cst {dimension_numbers = #tpu.dot_dimension_numbers<[1], [0], [0], [1], [0, 0, 1, 1], [], []>} : vector<8x1024xf32>, vector<1024x512xf32>, vector<8x512xf32> -> vector<8x512xf32>
    %3 = vector.extract_strided_slice %2 {offsets = [0, 384], sizes = [8, 128], strides = [1, 1]} : vector<8x512xf32> to vector<8x128xf32>
    %4 = vector.extract_strided_slice %2 {offsets = [0, 0], sizes = [8, 128], strides = [1, 1]} : vector<8x512xf32> to vector<8x128xf32>
    %c0_3 = arith.constant 0 : index
    %5 = memref.load %arg3[%c0_3] : memref<8xf32, #tpu.memory_space<smem>>
    %6 = vector.broadcast %5 : f32 to vector<8x128xf32>
    %7 = arith.addf %4, %6 : vector<8x128xf32>
    %8 = arith.negf %7 : vector<8x128xf32>
    %9 = math.exp %8 : vector<8x128xf32>
    %cst_4 = arith.constant 1.000000e+00 : f32
    %10 = vector.broadcast %cst_4 : f32 to vector<8x128xf32>
    %11 = arith.addf %10, %9 : vector<8x128xf32>
    %12 = arith.divf %10, %11 : vector<8x128xf32>
    %13 = vector.extract_strided_slice %2 {offsets = [0, 128], sizes = [8, 128], strides = [1, 1]} : vector<8x512xf32> to vector<8x128xf32>
    %c1 = arith.constant 1 : index
    %14 = memref.load %arg3[%c1] : memref<8xf32, #tpu.memory_space<smem>>
    %15 = vector.broadcast %14 : f32 to vector<8x128xf32>
    %16 = arith.addf %13, %15 : vector<8x128xf32>
    %17 = arith.negf %16 : vector<8x128xf32>
    %18 = math.exp %17 : vector<8x128xf32>
    %cst_5 = arith.constant 1.000000e+00 : f32
    %19 = vector.broadcast %cst_5 : f32 to vector<8x128xf32>
    %20 = arith.addf %19, %18 : vector<8x128xf32>
    %21 = arith.divf %19, %20 : vector<8x128xf32>
    %22 = vector.extract_strided_slice %2 {offsets = [0, 256], sizes = [8, 128], strides = [1, 1]} : vector<8x512xf32> to vector<8x128xf32>
    %c2 = arith.constant 2 : index
    %23 = memref.load %arg3[%c2] : memref<8xf32, #tpu.memory_space<smem>>
    %24 = vector.broadcast %23 : f32 to vector<8x128xf32>
    %25 = arith.addf %22, %24 : vector<8x128xf32>
    %c4 = arith.constant 4 : index
    %26 = memref.load %arg3[%c4] : memref<8xf32, #tpu.memory_space<smem>>
    %27 = vector.broadcast %26 : f32 to vector<8x128xf32>
    %28 = arith.mulf %3, %27 : vector<8x128xf32>
    %c3 = arith.constant 3 : index
    %29 = memref.load %arg3[%c3] : memref<8xf32, #tpu.memory_space<smem>>
    %30 = vector.broadcast %29 : f32 to vector<8x128xf32>
    %31 = arith.addf %28, %30 : vector<8x128xf32>
    %32 = arith.mulf %12, %31 : vector<8x128xf32>
    %33 = arith.addf %25, %32 : vector<8x128xf32>
    %34 = math.tanh %33 : vector<8x128xf32>
    %cst_6 = arith.constant 1.000000e+00 : f32
    %35 = vector.broadcast %cst_6 : f32 to vector<8x128xf32>
    %36 = arith.subf %35, %21 : vector<8x128xf32>
    %37 = arith.mulf %36, %34 : vector<8x128xf32>
    %38 = arith.mulf %21, %3 : vector<8x128xf32>
    %39 = arith.addf %37, %38 : vector<8x128xf32>
    %c5 = arith.constant 5 : index
    %40 = memref.load %arg3[%c5] : memref<8xf32, #tpu.memory_space<smem>>
    %41 = vector.broadcast %40 : f32 to vector<8x128xf32>
    %42 = arith.mulf %39, %41 : vector<8x128xf32>
    %c6 = arith.constant 6 : index
    %43 = memref.load %arg3[%c6] : memref<8xf32, #tpu.memory_space<smem>>
    %44 = vector.broadcast %43 : f32 to vector<8x128xf32>
    %45 = arith.addf %42, %44 : vector<8x128xf32>
    %c0_7 = arith.constant 0 : index
    %c0_8 = arith.constant 0 : index
    %46 = vector.load %arg4[%c0_7, %c0_8] : memref<8x128xf32, #tpu.memory_space<vmem>>, vector<8x128xf32>
    tpu.vector_store %arg4[%c0_7, %c0_8], %45 {strides = array<i32>} : memref<8x128xf32, #tpu.memory_space<vmem>>, vector<8x128xf32>,
    return
  }
  func.func @transform_0(%arg0: i32) -> (i32, i32) {
    %c0_i32 = arith.constant 0 : i32
    %c0_i32_0 = arith.constant 0 : i32
    return %arg0, %c0_i32 : i32, i32
  }
  func.func @transform_1(%arg0: i32) -> (i32, i32) {
    %c0_i32 = arith.constant 0 : i32
    %c0_i32_0 = arith.constant 0 : i32
    %c0_i32_1 = arith.constant 0 : i32
    return %c0_i32, %c0_i32_0 : i32, i32
  }
  func.func @transform_2(%arg0: i32) -> i32 {
    %c0_i32 = arith.constant 0 : i32
    %c0_i32_0 = arith.constant 0 : i32
    return %c0_i32 : i32
  }
  func.func @transform_3(%arg0: i32) -> (i32, i32) {
    %c0_i32 = arith.constant 0 : i32
    %c0_i32_0 = arith.constant 0 : i32
    return %arg0, %c0_i32 : i32, i32
  }
}

</mosaic_0001>

<llo_original>
// kernel: gru_module_forward.1
$region0: #{gru_module_forward.1}
  #allocation0 [shape = 'u32[]', space=smem, size = 0x4, offset = 0x4, fixed_abs, tag = 'smem constant byte address 0x4 - core index']
  #allocation1 [shape = 'u32[144,128]{1,0:T(1,128)}', space=vmem, size = 0x12000, scoped, tag = 'internal scratch']
  %s0 = inlined_call_operand.vmem [shape: f32[8,1024], index: 0, kind: input, shape index: {}]
  %s1 = inlined_call_operand.vmem [shape: f32[1024,512], index: 1, kind: input, shape index: {}]
  %s2 = inlined_call_operand.vmem [shape: f32[8], index: 2, kind: input, shape index: {}]
  %s3 = inlined_call_operand.vmem [shape: f32[8,128], index: 3, kind: output, shape index: {}]
  %s4 = sld [smem:[#allocation0]]
  $region26: #{gru_module_forward.1} parent=0
    _
  %s6 = ssub.s32 1, %s4
  %s7 = scalar_select 0, %s6, %s4
  $region1: #{gru_module_forward.1} parent=0
    #allocation2 [shape = 'u8[512]{0}', space=smem, size = 0x200, scoped, tag = 'input window, operand 2, single buffered']
    #allocation3 [shape = 's32[1]{0}', space=sflag, size = 0x4, scoped, tag = 'scoped memory for gru_module_forward.1']
    %8 = vsyncpa [#allocation3], 0
    // Predicated region
    $region2: #{gru_module_forward.1} parent=1 // pred_check
      _
    $region3: #{gru_module_forward.1} parent=1 // pred_check_branch
      %10 = sbr.rel (0) target = $region5
    $region4: #{gru_module_forward.1} parent=1 // pred_region
      _
    $region5: #{gru_module_forward.1} parent=1 // pred_fallthru
      _
    // Predicated region
    $region6: #{gru_module_forward.1} parent=1 // pred_check
      _
    $region7: #{gru_module_forward.1} parent=1 // pred_check_branch
      %12 = sbr.rel (0) target = $region9
    $region8: #{gru_module_forward.1} parent=1 // pred_region
      _
    $region9: #{gru_module_forward.1} parent=1 // pred_fallthru
      _
    // Predicated region
    $region10: #{gru_module_forward.1} parent=1 // pred_check
      _
    $region11: #{gru_module_forward.1} parent=1 // pred_check_branch
      %14 = sbr.rel (0) target = $region13
    $region12: #{gru_module_forward.1} parent=1 // pred_region
      %s16 = ssub.s32 16, 16
      %17 = vsyncadd [#allocation3], %s16
      %s19 = sshll.u32 %s2, 4
      %s20 = int_to_ptr.vmem [resolvable:$true] %s19
      %22 = dma.vmem_to_smem %s20, 16, [#allocation2], [#allocation3]
    $region13: #{gru_module_forward.1} parent=1 // pred_fallthru
      _
    // Predicated region
    $region14: #{gru_module_forward.1} parent=1 // pred_check
      _
    $region15: #{gru_module_forward.1} parent=1 // pred_check_branch
      %24 = sbr.rel (0) target = $region17
    $region16: #{gru_module_forward.1} parent=1 // pred_region
      %25 = dma.done [#allocation3], 16
    $region17: #{gru_module_forward.1} parent=1 // pred_fallthru
      _
    %26 = sfence
    %v27 = vld [vmem:[%s0] sm:$0xff]
    %v28 = vld [vmem:[%s0 + $0x8] sm:$0xff]
    %v29 = vld [vmem:[%s0 + $0x10] sm:$0xff]
    %v30 = vld [vmem:[%s0 + $0x18] sm:$0xff]
    %v31 = vld [vmem:[%s0 + $0x20] sm:$0xff]
    %v32 = vld [vmem:[%s0 + $0x28] sm:$0xff]
    %v33 = vld [vmem:[%s0 + $0x30] sm:$0xff]
    %v34 = vld [vmem:[%s0 + $0x38] sm:$0xff]
    %v35 = vld [vmem:[%s1] sm:$0xff]
    %v36 = vld [vmem:[%s1 + $0x8] sm:$0xff]
    %v37 = vld [vmem:[%s1 + $0x10] sm:$0xff]
    %v38 = vld [vmem:[%s1 + $0x18] sm:$0xff]
    %v39 = vld [vmem:[%s1 + $0x20] sm:$0xff]
    %v40 = vld [vmem:[%s1 + $0x28] sm:$0xff]
    %v41 = vld [vmem:[%s1 + $0x30] sm:$0xff]
    %v42 = vld [vmem:[%s1 + $0x38] sm:$0xff]
    %v43 = vld [vmem:[%s1 + $0x40] sm:$0xff]
    %v44 = vld [vmem:[%s1 + $0x48] sm:$0xff]
    %v45 = vld [vmem:[%s1 + $0x50] sm:$0xff]
    %v46 = vld [vmem:[%s1 + $0x58] sm:$0xff]
    %v47 = vld [vmem:[%s1 + $0x60] sm:$0xff]
    %v48 = vld [vmem:[%s1 + $0x68] sm:$0xff]
    %v49 = vld [vmem:[%s1 + $0x70] sm:$0xff]
    %v50 = vld [vmem:[%s1 + $0x78] sm:$0xff]
    %v51 = vld [vmem:[%s1 + $0x80] sm:$0xff]
    %v52 = vld [vmem:[%s1 + $0x88] sm:$0xff]
    %v53 = vld [vmem:[%s1 + $0x90] sm:$0xff]
    %v54 = vld [vmem:[%s1 + $0x98] sm:$0xff]
    %v55 = vld [vmem:[%s1 + $0xa0] sm:$0xff]
    %v56 = vld [vmem:[%s1 + $0xa8] sm:$0xff]
    %v57 = vld [vmem:[%s1 + $0xb0] sm:$0xff]
    %v58 = vld [vmem:[%s1 + $0xb8] sm:$0xff]
    %v59 = vld [vmem:[%s1 + $0xc0] sm:$0xff]
    %v60 = vld [vmem:[%s1 + $0xc8] sm:$0xff]
    %v61 = vld [vmem:[%s1 + $0xd0] sm:$0xff]
    %v62 = vld [vmem:[%s1 + $0xd8] sm:$0xff]
    %v63 = vld [vmem:[%s1 + $0xe0] sm:$0xff]
    %v64 = vld [vmem:[%s1 + $0xe8] sm:$0xff]
    %v65 = vld [vmem:[%s1 + $0xf0] sm:$0xff]
    %v66 = vld [vmem:[%s1 + $0xf8] sm:$0xff]
    %v67 = vld [vmem:[%s1 + $0x100] sm:$0xff]
    %v68 = vld [vmem:[%s1 + $0x108] sm:$0xff]
    %v69 = vld [vmem:[%s1 + $0x110] sm:$0xff]
    %v70 = vld [vmem:[%s1 + $0x118] sm:$0xff]
    %v71 = vld [vmem:[%s1 + $0x120] sm:$0xff]
    %v72 = vld [vmem:[%s1 + $0x128] sm:$0xff]
    %v73 = vld [vmem:[%s1 + $0x130] sm:$0xff]
    %v74 = vld [vmem:[%s1 + $0x138] sm:$0xff]
    %v75 = vld [vmem:[%s1 + $0x140] sm:$0xff]
    %v76 = vld [vmem:[%s1 + $0x148] sm:$0xff]
    %v77 = vld [vmem:[%s1 + $0x150] sm:$0xff]
    %v78 = vld [vmem:[%s1 + $0x158] sm:$0xff]
    %v79 = vld [vmem:[%s1 + $0x160] sm:$0xff]
    %v80 = vld [vmem:[%s1 + $0x168] sm:$0xff]
    %v81 = vld [vmem:[%s1 + $0x170] sm:$0xff]
    %v82 = vld [vmem:[%s1 + $0x178] sm:$0xff]
    %v83 = vld [vmem:[%s1 + $0x180] sm:$0xff]
    %v84 = vld [vmem:[%s1 + $0x188] sm:$0xff]
    %v85 = vld [vmem:[%s1 + $0x190] sm:$0xff]
    %v86 = vld [vmem:[%s1 + $0x198] sm:$0xff]
    %v87 = vld [vmem:[%s1 + $0x1a0] sm:$0xff]
    %v88 = vld [vmem:[%s1 + $0x1a8] sm:$0xff]
    %v89 = vld [vmem:[%s1 + $0x1b0] sm:$0xff]
    %v90 = vld [vmem:[%s1 + $0x1b8] sm:$0xff]
    %v91 = vld [vmem:[%s1 + $0x1c0] sm:$0xff]
    %v92 = vld [vmem:[%s1 + $0x1c8] sm:$0xff]
    %v93 = vld [vmem:[%s1 + $0x1d0] sm:$0xff]
    %v94 = vld [vmem:[%s1 + $0x1d8] sm:$0xff]
    %v95 = vld [vmem:[%s1 + $0x1e0] sm:$0xff]
    %v96 = vld [vmem:[%s1 + $0x1e8] sm:$0xff]
    %v97 = vld [vmem:[%s1 + $0x1f0] sm:$0xff]
    %v98 = vld [vmem:[%s1 + $0x1f8] sm:$0xff]
    %v99 = vld [vmem:[%s1 + $0x200] sm:$0xff]
    %v100 = vld [vmem:[%s1 + $0x208] sm:$0xff]
    %v101 = vld [vmem:[%s1 + $0x210] sm:$0xff]
    %v102 = vld [vmem:[%s1 + $0x218] sm:$0xff]
    %v103 = vld [vmem:[%s1 + $0x220] sm:$0xff]
    %v104 = vld [vmem:[%s1 + $0x228] sm:$0xff]
    %v105 = vld [vmem:[%s1 + $0x230] sm:$0xff]
    %v106 = vld [vmem:[%s1 + $0x238] sm:$0xff]
    %v107 = vld [vmem:[%s1 + $0x240] sm:$0xff]
    %v108 = vld [vmem:[%s1 + $0x248] sm:$0xff]
    %v109 = vld [vmem:[%s1 + $0x250] sm:$0xff]
    %v110 = vld [vmem:[%s1 + $0x258] sm:$0xff]
    %v111 = vld [vmem:[%s1 + $0x260] sm:$0xff]
    %v112 = vld [vmem:[%s1 + $0x268] sm:$0xff]
    %v113 = vld [vmem:[%s1 + $0x270] sm:$0xff]
    %v114 = vld [vmem:[%s1 + $0x278] sm:$0xff]
    %v115 = vld [vmem:[%s1 + $0x280] sm:$0xff]
    %v116 = vld [vmem:[%s1 + $0x288] sm:$0xff]
    %v117 = vld [vmem:[%s1 + $0x290] sm:$0xff]
    %v118 = vld [vmem:[%s1 + $0x298] sm:$0xff]
    %v119 = vld [vmem:[%s1 + $0x2a0] sm:$0xff]
    %v120 = vld [vmem:[%s1 + $0x2a8] sm:$0xff]
    %v121 = vld [vmem:[%s1 + $0x2b0] sm:$0xff]
    %v122 = vld [vmem:[%s1 + $0x2b8] sm:$0xff]
    %v123 = vld [vmem:[%s1 + $0x2c0] sm:$0xff]
    %v124 = vld [vmem:[%s1 + $0x2c8] sm:$0xff]
    %v125 = vld [vmem:[%s1 + $0x2d0] sm:$0xff]
    %v126 = vld [vmem:[%s1 + $0x2d8] sm:$0xff]
    %v127 = vld [vmem:[%s1 + $0x2e0] sm:$0xff]
    %v128 = vld [vmem:[%s1 + $0x2e8] sm:$0xff]
    %v129 = vld [vmem:[%s1 + $0x2f0] sm:$0xff]
    %v130 = vld [vmem:[%s1 + $0x2f8] sm:$0xff]
    %v131 = vld [vmem:[%s1 + $0x300] sm:$0xff]
    %v132 = vld [vmem:[%s1 + $0x308] sm:$0xff]
    %v133 = vld [vmem:[%s1 + $0x310] sm:$0xff]
    %v134 = vld [vmem:[%s1 + $0x318] sm:$0xff]
    %v135 = vld [vmem:[%s1 + $0x320] sm:$0xff]
    %v136 = vld [vmem:[%s1 + $0x328] sm:$0xff]
    %v137 = vld [vmem:[%s1 + $0x330] sm:$0xff]
    %v138 = vld [vmem:[%s1 + $0x338] sm:$0xff]
    %v139 = vld [vmem:[%s1 + $0x340] sm:$0xff]
    %v140 = vld [vmem:[%s1 + $0x348] sm:$0xff]
    %v141 = vld [vmem:[%s1 + $0x350] sm:$0xff]
    %v142 = vld [vmem:[%s1 + $0x358] sm:$0xff]
    %v143 = vld [vmem:[%s1 + $0x360] sm:$0xff]
    %v144 = vld [vmem:[%s1 + $0x368] sm:$0xff]
    %v145 = vld [vmem:[%s1 + $0x370] sm:$0xff]
    %v146 = vld [vmem:[%s1 + $0x378] sm:$0xff]
    %v147 = vld [vmem:[%s1 + $0x380] sm:$0xff]
    %v148 = vld [vmem:[%s1 + $0x388] sm:$0xff]
    %v149 = vld [vmem:[%s1 + $0x390] sm:$0xff]
    %v150 = vld [vmem:[%s1 + $0x398] sm:$0xff]
    %v151 = vld [vmem:[%s1 + $0x3a0] sm:$0xff]
    %v152 = vld [vmem:[%s1 + $0x3a8] sm:$0xff]
    %v153 = vld [vmem:[%s1 + $0x3b0] sm:$0xff]
    %v154 = vld [vmem:[%s1 + $0x3b8] sm:$0xff]
    %v155 = vld [vmem:[%s1 + $0x3c0] sm:$0xff]
    %v156 = vld [vmem:[%s1 + $0x3c8] sm:$0xff]
    %v157 = vld [vmem:[%s1 + $0x3d0] sm:$0xff]
    %v158 = vld [vmem:[%s1 + $0x3d8] sm:$0xff]
    %v159 = vld [vmem:[%s1 + $0x3e0] sm:$0xff]
    %v160 = vld [vmem:[%s1 + $0x3e8] sm:$0xff]
    %v161 = vld [vmem:[%s1 + $0x3f0] sm:$0xff]
    %v162 = vld [vmem:[%s1 + $0x3f8] sm:$0xff]
    %v163 = vld [vmem:[%s1 + $0x400] sm:$0xff]
    %v164 = vld [vmem:[%s1 + $0x408] sm:$0xff]
    %v165 = vld [vmem:[%s1 + $0x410] sm:$0xff]
    %v166 = vld [vmem:[%s1 + $0x418] sm:$0xff]
    %v167 = vld [vmem:[%s1 + $0x420] sm:$0xff]
    %v168 = vld [vmem:[%s1 + $0x428] sm:$0xff]
    %v169 = vld [vmem:[%s1 + $0x430] sm:$0xff]
    %v170 = vld [vmem:[%s1 + $0x438] sm:$0xff]
    %v171 = vld [vmem:[%s1 + $0x440] sm:$0xff]
    %v172 = vld [vmem:[%s1 + $0x448] sm:$0xff]
    %v173 = vld [vmem:[%s1 + $0x450] sm:$0xff]
    %v174 = vld [vmem:[%s1 + $0x458] sm:$0xff]
    %v175 = vld [vmem:[%s1 + $0x460] sm:$0xff]
    %v176 = vld [vmem:[%s1 + $0x468] sm:$0xff]
    %v177 = vld [vmem:[%s1 + $0x470] sm:$0xff]
    %v178 = vld [vmem:[%s1 + $0x478] sm:$0xff]
    %v179 = vld [vmem:[%s1 + $0x480] sm:$0xff]
    %v180 = vld [vmem:[%s1 + $0x488] sm:$0xff]
    %v181 = vld [vmem:[%s1 + $0x490] sm:$0xff]
    %v182 = vld [vmem:[%s1 + $0x498] sm:$0xff]
    %v183 = vld [vmem:[%s1 + $0x4a0] sm:$0xff]
    %v184 = vld [vmem:[%s1 + $0x4a8] sm:$0xff]
    %v185 = vld [vmem:[%s1 + $0x4b0] sm:$0xff]
    %v186 = vld [vmem:[%s1 + $0x4b8] sm:$0xff]
    %v187 = vld [vmem:[%s1 + $0x4c0] sm:$0xff]
    %v188 = vld [vmem:[%s1 + $0x4c8] sm:$0xff]
    %v189 = vld [vmem:[%s1 + $0x4d0] sm:$0xff]
    %v190 = vld [vmem:[%s1 + $0x4d8] sm:$0xff]
    %v191 = vld [vmem:[%s1 + $0x4e0] sm:$0xff]
    %v192 = vld [vmem:[%s1 + $0x4e8] sm:$0xff]
    %v193 = vld [vmem:[%s1 + $0x4f0] sm:$0xff]
    %v194 = vld [vmem:[%s1 + $0x4f8] sm:$0xff]
    %v195 = vld [vmem:[%s1 + $0x500] sm:$0xff]
    %v196 = vld [vmem:[%s1 + $0x508] sm:$0xff]
    %v197 = vld [vmem:[%s1 + $0x510] sm:$0xff]
    %v198 = vld [vmem:[%s1 + $0x518] sm:$0xff]
    %v199 = vld [vmem:[%s1 + $0x520] sm:$0xff]
    %v200 = vld [vmem:[%s1 + $0x528] sm:$0xff]
    %v201 = vld [vmem:[%s1 + $0x530] sm:$0xff]
    %v202 = vld [vmem:[%s1 + $0x538] sm:$0xff]
    %v203 = vld [vmem:[%s1 + $0x540] sm:$0xff]
    %v204 = vld [vmem:[%s1 + $0x548] sm:$0xff]
    %v205 = vld [vmem:[%s1 + $0x550] sm:$0xff]
    %v206 = vld [vmem:[%s1 + $0x558] sm:$0xff]
    %v207 = vld [vmem:[%s1 + $0x560] sm:$0xff]
    %v208 = vld [vmem:[%s1 + $0x568] sm:$0xff]
    %v209 = vld [vmem:[%s1 + $0x570] sm:$0xff]
    %v210 = vld [vmem:[%s1 + $0x578] sm:$0xff]
    %v211 = vld [vmem:[%s1 + $0x580] sm:$0xff]
    %v212 = vld [vmem:[%s1 + $0x588] sm:$0xff]
    %v213 = vld [vmem:[%s1 + $0x590] sm:$0xff]
    %v214 = vld [vmem:[%s1 + $0x598] sm:$0xff]
    %v215 = vld [vmem:[%s1 + $0x5a0] sm:$0xff]
    %v216 = vld [vmem:[%s1 + $0x5a8] sm:$0xff]
    %v217 = vld [vmem:[%s1 + $0x5b0] sm:$0xff]
    %v218 = vld [vmem:[%s1 + $0x5b8] sm:$0xff]
    %v219 = vld [vmem:[%s1 + $0x5c0] sm:$0xff]
    %v220 = vld [vmem:[%s1 + $0x5c8] sm:$0xff]
    %v221 = vld [vmem:[%s1 + $0x5d0] sm:$0xff]
    %v222 = vld [vmem:[%s1 + $0x5d8] sm:$0xff]
    %v223 = vld [vmem:[%s1 + $0x5e0] sm:$0xff]
    %v224 = vld [vmem:[%s1 + $0x5e8] sm:$0xff]
    %v225 = vld [vmem:[%s1 + $0x5f0] sm:$0xff]
    %v226 = vld [vmem:[%s1 + $0x5f8] sm:$0xff]
    %v227 = vld [vmem:[%s1 + $0x600] sm:$0xff]
    %v228 = vld [vmem:[%s1 + $0x608] sm:$0xff]
    %v229 = vld [vmem:[%s1 + $0x610] sm:$0xff]
    %v230 = vld [vmem:[%s1 + $0x618] sm:$0xff]
    %v231 = vld [vmem:[%s1 + $0x620] sm:$0xff]
    %v232 = vld [vmem:[%s1 + $0x628] sm:$0xff]
    %v233 = vld [vmem:[%s1 + $0x630] sm:$0xff]
    %v234 = vld [vmem:[%s1 + $0x638] sm:$0xff]
    %v235 = vld [vmem:[%s1 + $0x640] sm:$0xff]
    %v236 = vld [vmem:[%s1 + $0x648] sm:$0xff]
    %v237 = vld [vmem:[%s1 + $0x650] sm:$0xff]
    %v238 = vld [vmem:[%s1 + $0x658] sm:$0xff]
    %v239 = vld [vmem:[%s1 + $0x660] sm:$0xff]
    %v240 = vld [vmem:[%s1 + $0x668] sm:$0xff]
    %v241 = vld [vmem:[%s1 + $0x670] sm:$0xff]
    %v242 = vld [vmem:[%s1 + $0x678] sm:$0xff]
    %v243 = vld [vmem:[%s1 + $0x680] sm:$0xff]
    %v244 = vld [vmem:[%s1 + $0x688] sm:$0xff]
    %v245 = vld [vmem:[%s1 + $0x690] sm:$0xff]
    %v246 = vld [vmem:[%s1 + $0x698] sm:$0xff]
    %v247 = vld [vmem:[%s1 + $0x6a0] sm:$0xff]
    %v248 = vld [vmem:[%s1 + $0x6a8] sm:$0xff]
    %v249 = vld [vmem:[%s1 + $0x6b0] sm:$0xff]
    %v250 = vld [vmem:[%s1 + $0x6b8] sm:$0xff]
    %v251 = vld [vmem:[%s1 + $0x6c0] sm:$0xff]
    %v252 = vld [vmem:[%s1 + $0x6c8] sm:$0xff]
    %v253 = vld [vmem:[%s1 + $0x6d0] sm:$0xff]
    %v254 = vld [vmem:[%s1 + $0x6d8] sm:$0xff]
    %v255 = vld [vmem:[%s1 + $0x6e0] sm:$0xff]
    %v256 = vld [vmem:[%s1 + $0x6e8] sm:$0xff]
    %v257 = vld [vmem:[%s1 + $0x6f0] sm:$0xff]
    %v258 = vld [vmem:[%s1 + $0x6f8] sm:$0xff]
    %v259 = vld [vmem:[%s1 + $0x700] sm:$0xff]
    %v260 = vld [vmem:[%s1 + $0x708] sm:$0xff]
    %v261 = vld [vmem:[%s1 + $0x710] sm:$0xff]
    %v262 = vld [vmem:[%s1 + $0x718] sm:$0xff]
    %v263 = vld [vmem:[%s1 + $0x720] sm:$0xff]
    %v264 = vld [vmem:[%s1 + $0x728] sm:$0xff]
    %v265 = vld [vmem:[%s1 + $0x730] sm:$0xff]
    %v266 = vld [vmem:[%s1 + $0x738] sm:$0xff]
    %v267 = vld [vmem:[%s1 + $0x740] sm:$0xff]
    %v268 = vld [vmem:[%s1 + $0x748] sm:$0xff]
    %v269 = vld [vmem:[%s1 + $0x750] sm:$0xff]
    %v270 = vld [vmem:[%s1 + $0x758] sm:$0xff]
    %v271 = vld [vmem:[%s1 + $0x760] sm:$0xff]
    %v272 = vld [vmem:[%s1 + $0x768] sm:$0xff]
    %v273 = vld [vmem:[%s1 + $0x770] sm:$0xff]
    %v274 = vld [vmem:[%s1 + $0x778] sm:$0xff]
    %v275 = vld [vmem:[%s1 + $0x780] sm:$0xff]
    %v276 = vld [vmem:[%s1 + $0x788] sm:$0xff]
    %v277 = vld [vmem:[%s1 + $0x790] sm:$0xff]
    %v278 = vld [vmem:[%s1 + $0x798] sm:$0xff]
    %v279 = vld [vmem:[%s1 + $0x7a0] sm:$0xff]
    %v280 = vld [vmem:[%s1 + $0x7a8] sm:$0xff]
    %v281 = vld [vmem:[%s1 + $0x7b0] sm:$0xff]
    %v282 = vld [vmem:[%s1 + $0x7b8] sm:$0xff]
    %v283 = vld [vmem:[%s1 + $0x7c0] sm:$0xff]
    %v284 = vld [vmem:[%s1 + $0x7c8] sm:$0xff]
    %v285 = vld [vmem:[%s1 + $0x7d0] sm:$0xff]
    %v286 = vld [vmem:[%s1 + $0x7d8] sm:$0xff]
    %v287 = vld [vmem:[%s1 + $0x7e0] sm:$0xff]
    %v288 = vld [vmem:[%s1 + $0x7e8] sm:$0xff]
    %v289 = vld [vmem:[%s1 + $0x7f0] sm:$0xff]
    %v290 = vld [vmem:[%s1 + $0x7f8] sm:$0xff]
    %v291 = vld [vmem:[%s1 + $0x800] sm:$0xff]
    %v292 = vld [vmem:[%s1 + $0x808] sm:$0xff]
    %v293 = vld [vmem:[%s1 + $0x810] sm:$0xff]
    %v294 = vld [vmem:[%s1 + $0x818] sm:$0xff]
    %v295 = vld [vmem:[%s1 + $0x820] sm:$0xff]
    %v296 = vld [vmem:[%s1 + $0x828] sm:$0xff]
    %v297 = vld [vmem:[%s1 + $0x830] sm:$0xff]
    %v298 = vld [vmem:[%s1 + $0x838] sm:$0xff]
    %v299 = vld [vmem:[%s1 + $0x840] sm:$0xff]
    %v300 = vld [vmem:[%s1 + $0x848] sm:$0xff]
    %v301 = vld [vmem:[%s1 + $0x850] sm:$0xff]
    %v302 = vld [vmem:[%s1 + $0x858] sm:$0xff]
    %v303 = vld [vmem:[%s1 + $0x860] sm:$0xff]
    %v304 = vld [vmem:[%s1 + $0x868] sm:$0xff]
    %v305 = vld [vmem:[%s1 + $0x870] sm:$0xff]
    %v306 = vld [vmem:[%s1 + $0x878] sm:$0xff]
    %v307 = vld [vmem:[%s1 + $0x880] sm:$0xff]
    %v308 = vld [vmem:[%s1 + $0x888] sm:$0xff]
    %v309 = vld [vmem:[%s1 + $0x890] sm:$0xff]
    %v310 = vld [vmem:[%s1 + $0x898] sm:$0xff]
    %v311 = vld [vmem:[%s1 + $0x8a0] sm:$0xff]
    %v312 = vld [vmem:[%s1 + $0x8a8] sm:$0xff]
    %v313 = vld [vmem:[%s1 + $0x8b0] sm:$0xff]
    %v314 = vld [vmem:[%s1 + $0x8b8] sm:$0xff]
    %v315 = vld [vmem:[%s1 + $0x8c0] sm:$0xff]
    %v316 = vld [vmem:[%s1 + $0x8c8] sm:$0xff]
    %v317 = vld [vmem:[%s1 + $0x8d0] sm:$0xff]
    %v318 = vld [vmem:[%s1 + $0x8d8] sm:$0xff]
    %v319 = vld [vmem:[%s1 + $0x8e0] sm:$0xff]
    %v320 = vld [vmem:[%s1 + $0x8e8] sm:$0xff]
    %v321 = vld [vmem:[%s1 + $0x8f0] sm:$0xff]
    %v322 = vld [vmem:[%s1 + $0x8f8] sm:$0xff]
    %v323 = vld [vmem:[%s1 + $0x900] sm:$0xff]
    %v324 = vld [vmem:[%s1 + $0x908] sm:$0xff]
    %v325 = vld [vmem:[%s1 + $0x910] sm:$0xff]
    %v326 = vld [vmem:[%s1 + $0x918] sm:$0xff]
    %v327 = vld [vmem:[%s1 + $0x920] sm:$0xff]
    %v328 = vld [vmem:[%s1 + $0x928] sm:$0xff]
    %v329 = vld [vmem:[%s1 + $0x930] sm:$0xff]
    %v330 = vld [vmem:[%s1 + $0x938] sm:$0xff]
    %v331 = vld [vmem:[%s1 + $0x940] sm:$0xff]
    %v332 = vld [vmem:[%s1 + $0x948] sm:$0xff]
    %v333 = vld [vmem:[%s1 + $0x950] sm:$0xff]
    %v334 = vld [vmem:[%s1 + $0x958] sm:$0xff]
    %v335 = vld [vmem:[%s1 + $0x960] sm:$0xff]
    %v336 = vld [vmem:[%s1 + $0x968] sm:$0xff]
    %v337 = vld [vmem:[%s1 + $0x970] sm:$0xff]
    %v338 = vld [vmem:[%s1 + $0x978] sm:$0xff]
    %v339 = vld [vmem:[%s1 + $0x980] sm:$0xff]
    %v340 = vld [vmem:[%s1 + $0x988] sm:$0xff]
    %v341 = vld [vmem:[%s1 + $0x990] sm:$0xff]
    %v342 = vld [vmem:[%s1 + $0x998] sm:$0xff]
    %v343 = vld [vmem:[%s1 + $0x9a0] sm:$0xff]
    %v344 = vld [vmem:[%s1 + $0x9a8] sm:$0xff]
    %v345 = vld [vmem:[%s1 + $0x9b0] sm:$0xff]
    %v346 = vld [vmem:[%s1 + $0x9b8] sm:$0xff]
    %v347 = vld [vmem:[%s1 + $0x9c0] sm:$0xff]
    %v348 = vld [vmem:[%s1 + $0x9c8] sm:$0xff]
    %v349 = vld [vmem:[%s1 + $0x9d0] sm:$0xff]
    %v350 = vld [vmem:[%s1 + $0x9d8] sm:$0xff]
    %v351 = vld [vmem:[%s1 + $0x9e0] sm:$0xff]
    %v352 = vld [vmem:[%s1 + $0x9e8] sm:$0xff]
    %v353 = vld [vmem:[%s1 + $0x9f0] sm:$0xff]
    %v354 = vld [vmem:[%s1 + $0x9f8] sm:$0xff]
    %v355 = vld [vmem:[%s1 + $0xa00] sm:$0xff]
    %v356 = vld [vmem:[%s1 + $0xa08] sm:$0xff]
    %v357 = vld [vmem:[%s1 + $0xa10] sm:$0xff]
    %v358 = vld [vmem:[%s1 + $0xa18] sm:$0xff]
    %v359 = vld [vmem:[%s1 + $0xa20] sm:$0xff]
    %v360 = vld [vmem:[%s1 + $0xa28] sm:$0xff]
    %v361 = vld [vmem:[%s1 + $0xa30] sm:$0xff]
    %v362 = vld [vmem:[%s1 + $0xa38] sm:$0xff]
    %v363 = vld [vmem:[%s1 + $0xa40] sm:$0xff]
    %v364 = vld [vmem:[%s1 + $0xa48] sm:$0xff]
    %v365 = vld [vmem:[%s1 + $0xa50] sm:$0xff]
    %v366 = vld [vmem:[%s1 + $0xa58] sm:$0xff]
    %v367 = vld [vmem:[%s1 + $0xa60] sm:$0xff]
    %v368 = vld [vmem:[%s1 + $0xa68] sm:$0xff]
    %v369 = vld [vmem:[%s1 + $0xa70] sm:$0xff]
    %v370 = vld [vmem:[%s1 + $0xa78] sm:$0xff]
    %v371 = vld [vmem:[%s1 + $0xa80] sm:$0xff]
    %v372 = vld [vmem:[%s1 + $0xa88] sm:$0xff]
    %v373 = vld [vmem:[%s1 + $0xa90] sm:$0xff]
    %v374 = vld [vmem:[%s1 + $0xa98] sm:$0xff]
    %v375 = vld [vmem:[%s1 + $0xaa0] sm:$0xff]
    %v376 = vld [vmem:[%s1 + $0xaa8] sm:$0xff]
    %v377 = vld [vmem:[%s1 + $0xab0] sm:$0xff]
    %v378 = vld [vmem:[%s1 + $0xab8] sm:$0xff]
    %v379 = vld [vmem:[%s1 + $0xac0] sm:$0xff]
    %v380 = vld [vmem:[%s1 + $0xac8] sm:$0xff]
    %v381 = vld [vmem:[%s1 + $0xad0] sm:$0xff]
    %v382 = vld [vmem:[%s1 + $0xad8] sm:$0xff]
    %v383 = vld [vmem:[%s1 + $0xae0] sm:$0xff]
    %v384 = vld [vmem:[%s1 + $0xae8] sm:$0xff]
    %v385 = vld [vmem:[%s1 + $0xaf0] sm:$0xff]
    %v386 = vld [vmem:[%s1 + $0xaf8] sm:$0xff]
    %v387 = vld [vmem:[%s1 + $0xb00] sm:$0xff]
    %v388 = vld [vmem:[%s1 + $0xb08] sm:$0xff]
    %v389 = vld [vmem:[%s1 + $0xb10] sm:$0xff]
    %v390 = vld [vmem:[%s1 + $0xb18] sm:$0xff]
    %v391 = vld [vmem:[%s1 + $0xb20] sm:$0xff]
    %v392 = vld [vmem:[%s1 + $0xb28] sm:$0xff]
    %v393 = vld [vmem:[%s1 + $0xb30] sm:$0xff]
    %v394 = vld [vmem:[%s1 + $0xb38] sm:$0xff]
    %v395 = vld [vmem:[%s1 + $0xb40] sm:$0xff]
    %v396 = vld [vmem:[%s1 + $0xb48] sm:$0xff]
    %v397 = vld [vmem:[%s1 + $0xb50] sm:$0xff]
    %v398 = vld [vmem:[%s1 + $0xb58] sm:$0xff]
    %v399 = vld [vmem:[%s1 + $0xb60] sm:$0xff]
    %v400 = vld [vmem:[%s1 + $0xb68] sm:$0xff]
    %v401 = vld [vmem:[%s1 + $0xb70] sm:$0xff]
    %v402 = vld [vmem:[%s1 + $0xb78] sm:$0xff]
    %v403 = vld [vmem:[%s1 + $0xb80] sm:$0xff]
    %v404 = vld [vmem:[%s1 + $0xb88] sm:$0xff]
    %v405 = vld [vmem:[%s1 + $0xb90] sm:$0xff]
    %v406 = vld [vmem:[%s1 + $0xb98] sm:$0xff]
    %v407 = vld [vmem:[%s1 + $0xba0] sm:$0xff]
    %v408 = vld [vmem:[%s1 + $0xba8] sm:$0xff]
    %v409 = vld [vmem:[%s1 + $0xbb0] sm:$0xff]
    %v410 = vld [vmem:[%s1 + $0xbb8] sm:$0xff]
    %v411 = vld [vmem:[%s1 + $0xbc0] sm:$0xff]
    %v412 = vld [vmem:[%s1 + $0xbc8] sm:$0xff]
    %v413 = vld [vmem:[%s1 + $0xbd0] sm:$0xff]
    %v414 = vld [vmem:[%s1 + $0xbd8] sm:$0xff]
    %v415 = vld [vmem:[%s1 + $0xbe0] sm:$0xff]
    %v416 = vld [vmem:[%s1 + $0xbe8] sm:$0xff]
    %v417 = vld [vmem:[%s1 + $0xbf0] sm:$0xff]
    %v418 = vld [vmem:[%s1 + $0xbf8] sm:$0xff]
    %v419 = vld [vmem:[%s1 + $0xc00] sm:$0xff]
    %v420 = vld [vmem:[%s1 + $0xc08] sm:$0xff]
    %v421 = vld [vmem:[%s1 + $0xc10] sm:$0xff]
    %v422 = vld [vmem:[%s1 + $0xc18] sm:$0xff]
    %v423 = vld [vmem:[%s1 + $0xc20] sm:$0xff]
    %v424 = vld [vmem:[%s1 + $0xc28] sm:$0xff]
    %v425 = vld [vmem:[%s1 + $0xc30] sm:$0xff]
    %v426 = vld [vmem:[%s1 + $0xc38] sm:$0xff]
    %v427 = vld [vmem:[%s1 + $0xc40] sm:$0xff]
    %v428 = vld [vmem:[%s1 + $0xc48] sm:$0xff]
    %v429 = vld [vmem:[%s1 + $0xc50] sm:$0xff]
    %v430 = vld [vmem:[%s1 + $0xc58] sm:$0xff]
    %v431 = vld [vmem:[%s1 + $0xc60] sm:$0xff]
    %v432 = vld [vmem:[%s1 + $0xc68] sm:$0xff]
    %v433 = vld [vmem:[%s1 + $0xc70] sm:$0xff]
    %v434 = vld [vmem:[%s1 + $0xc78] sm:$0xff]
    %v435 = vld [vmem:[%s1 + $0xc80] sm:$0xff]
    %v436 = vld [vmem:[%s1 + $0xc88] sm:$0xff]
    %v437 = vld [vmem:[%s1 + $0xc90] sm:$0xff]
    %v438 = vld [vmem:[%s1 + $0xc98] sm:$0xff]
    %v439 = vld [vmem:[%s1 + $0xca0] sm:$0xff]
    %v440 = vld [vmem:[%s1 + $0xca8] sm:$0xff]
    %v441 = vld [vmem:[%s1 + $0xcb0] sm:$0xff]
    %v442 = vld [vmem:[%s1 + $0xcb8] sm:$0xff]
    %v443 = vld [vmem:[%s1 + $0xcc0] sm:$0xff]
    %v444 = vld [vmem:[%s1 + $0xcc8] sm:$0xff]
    %v445 = vld [vmem:[%s1 + $0xcd0] sm:$0xff]
    %v446 = vld [vmem:[%s1 + $0xcd8] sm:$0xff]
    %v447 = vld [vmem:[%s1 + $0xce0] sm:$0xff]
    %v448 = vld [vmem:[%s1 + $0xce8] sm:$0xff]
    %v449 = vld [vmem:[%s1 + $0xcf0] sm:$0xff]
    %v450 = vld [vmem:[%s1 + $0xcf8] sm:$0xff]
    %v451 = vld [vmem:[%s1 + $0xd00] sm:$0xff]
    %v452 = vld [vmem:[%s1 + $0xd08] sm:$0xff]
    %v453 = vld [vmem:[%s1 + $0xd10] sm:$0xff]
    %v454 = vld [vmem:[%s1 + $0xd18] sm:$0xff]
    %v455 = vld [vmem:[%s1 + $0xd20] sm:$0xff]
    %v456 = vld [vmem:[%s1 + $0xd28] sm:$0xff]
    %v457 = vld [vmem:[%s1 + $0xd30] sm:$0xff]
    %v458 = vld [vmem:[%s1 + $0xd38] sm:$0xff]
    %v459 = vld [vmem:[%s1 + $0xd40] sm:$0xff]
    %v460 = vld [vmem:[%s1 + $0xd48] sm:$0xff]
    %v461 = vld [vmem:[%s1 + $0xd50] sm:$0xff]
    %v462 = vld [vmem:[%s1 + $0xd58] sm:$0xff]
    %v463 = vld [vmem:[%s1 + $0xd60] sm:$0xff]
    %v464 = vld [vmem:[%s1 + $0xd68] sm:$0xff]
    %v465 = vld [vmem:[%s1 + $0xd70] sm:$0xff]
    %v466 = vld [vmem:[%s1 + $0xd78] sm:$0xff]
    %v467 = vld [vmem:[%s1 + $0xd80] sm:$0xff]
    %v468 = vld [vmem:[%s1 + $0xd88] sm:$0xff]
    %v469 = vld [vmem:[%s1 + $0xd90] sm:$0xff]
    %v470 = vld [vmem:[%s1 + $0xd98] sm:$0xff]
    %v471 = vld [vmem:[%s1 + $0xda0] sm:$0xff]
    %v472 = vld [vmem:[%s1 + $0xda8] sm:$0xff]
    %v473 = vld [vmem:[%s1 + $0xdb0] sm:$0xff]
    %v474 = vld [vmem:[%s1 + $0xdb8] sm:$0xff]
    %v475 = vld [vmem:[%s1 + $0xdc0] sm:$0xff]
    %v476 = vld [vmem:[%s1 + $0xdc8] sm:$0xff]
    %v477 = vld [vmem:[%s1 + $0xdd0] sm:$0xff]
    %v478 = vld [vmem:[%s1 + $0xdd8] sm:$0xff]
    %v479 = vld [vmem:[%s1 + $0xde0] sm:$0xff]
    %v480 = vld [vmem:[%s1 + $0xde8] sm:$0xff]
    %v481 = vld [vmem:[%s1 + $0xdf0] sm:$0xff]
    %v482 = vld [vmem:[%s1 + $0xdf8] sm:$0xff]
    %v483 = vld [vmem:[%s1 + $0xe00] sm:$0xff]
    %v484 = vld [vmem:[%s1 + $0xe08] sm:$0xff]
    %v485 = vld [vmem:[%s1 + $0xe10] sm:$0xff]
    %v486 = vld [vmem:[%s1 + $0xe18] sm:$0xff]
    %v487 = vld [vmem:[%s1 + $0xe20] sm:$0xff]
    %v488 = vld [vmem:[%s1 + $0xe28] sm:$0xff]
    %v489 = vld [vmem:[%s1 + $0xe30] sm:$0xff]
    %v490 = vld [vmem:[%s1 + $0xe38] sm:$0xff]
    %v491 = vld [vmem:[%s1 + $0xe40] sm:$0xff]
    %v492 = vld [vmem:[%s1 + $0xe48] sm:$0xff]
    %v493 = vld [vmem:[%s1 + $0xe50] sm:$0xff]
    %v494 = vld [vmem:[%s1 + $0xe58] sm:$0xff]
    %v495 = vld [vmem:[%s1 + $0xe60] sm:$0xff]
    %v496 = vld [vmem:[%s1 + $0xe68] sm:$0xff]
    %v497 = vld [vmem:[%s1 + $0xe70] sm:$0xff]
    %v498 = vld [vmem:[%s1 + $0xe78] sm:$0xff]
    %v499 = vld [vmem:[%s1 + $0xe80] sm:$0xff]
    %v500 = vld [vmem:[%s1 + $0xe88] sm:$0xff]
    %v501 = vld [vmem:[%s1 + $0xe90] sm:$0xff]
    %v502 = vld [vmem:[%s1 + $0xe98] sm:$0xff]
    %v503 = vld [vmem:[%s1 + $0xea0] sm:$0xff]
    %v504 = vld [vmem:[%s1 + $0xea8] sm:$0xff]
    %v505 = vld [vmem:[%s1 + $0xeb0] sm:$0xff]
    %v506 = vld [vmem:[%s1 + $0xeb8] sm:$0xff]
    %v507 = vld [vmem:[%s1 + $0xec0] sm:$0xff]
    %v508 = vld [vmem:[%s1 + $0xec8] sm:$0xff]
    %v509 = vld [vmem:[%s1 + $0xed0] sm:$0xff]
    %v510 = vld [vmem:[%s1 + $0xed8] sm:$0xff]
    %v511 = vld [vmem:[%s1 + $0xee0] sm:$0xff]
    %v512 = vld [vmem:[%s1 + $0xee8] sm:$0xff]
    %v513 = vld [vmem:[%s1 + $0xef0] sm:$0xff]
    %v514 = vld [vmem:[%s1 + $0xef8] sm:$0xff]
    %v515 = vld [vmem:[%s1 + $0xf00] sm:$0xff]
    %v516 = vld [vmem:[%s1 + $0xf08] sm:$0xff]
    %v517 = vld [vmem:[%s1 + $0xf10] sm:$0xff]
    %v518 = vld [vmem:[%s1 + $0xf18] sm:$0xff]
    %v519 = vld [vmem:[%s1 + $0xf20] sm:$0xff]
    %v520 = vld [vmem:[%s1 + $0xf28] sm:$0xff]
    %v521 = vld [vmem:[%s1 + $0xf30] sm:$0xff]
    %v522 = vld [vmem:[%s1 + $0xf38] sm:$0xff]
    %v523 = vld [vmem:[%s1 + $0xf40] sm:$0xff]
    %v524 = vld [vmem:[%s1 + $0xf48] sm:$0xff]
    %v525 = vld [vmem:[%s1 + $0xf50] sm:$0xff]
    %v526 = vld [vmem:[%s1 + $0xf58] sm:$0xff]
    %v527 = vld [vmem:[%s1 + $0xf60] sm:$0xff]
    %v528 = vld [vmem:[%s1 + $0xf68] sm:$0xff]
    %v529 = vld [vmem:[%s1 + $0xf70] sm:$0xff]
    %v530 = vld [vmem:[%s1 + $0xf78] sm:$0xff]
    %v531 = vld [vmem:[%s1 + $0xf80] sm:$0xff]
    %v532 = vld [vmem:[%s1 + $0xf88] sm:$0xff]
    %v533 = vld [vmem:[%s1 + $0xf90] sm:$0xff]
    %v534 = vld [vmem:[%s1 + $0xf98] sm:$0xff]
    %v535 = vld [vmem:[%s1 + $0xfa0] sm:$0xff]
    %v536 = vld [vmem:[%s1 + $0xfa8] sm:$0xff]
    %v537 = vld [vmem:[%s1 + $0xfb0] sm:$0xff]
    %v538 = vld [vmem:[%s1 + $0xfb8] sm:$0xff]
    %v539 = vld [vmem:[%s1 + $0xfc0] sm:$0xff]
    %v540 = vld [vmem:[%s1 + $0xfc8] sm:$0xff]
    %v541 = vld [vmem:[%s1 + $0xfd0] sm:$0xff]
    %v542 = vld [vmem:[%s1 + $0xfd8] sm:$0xff]
    %v543 = vld [vmem:[%s1 + $0xfe0] sm:$0xff]
    %v544 = vld [vmem:[%s1 + $0xfe8] sm:$0xff]
    %v545 = vld [vmem:[%s1 + $0xff0] sm:$0xff]
    %v546 = vld [vmem:[%s1 + $0xff8] sm:$0xff]
    %547 = vmatprep.subr.mxu0 %v36
    %548 = vmatpush1.msra.mxu0 %v35
    %549 = vmatprep.subr.mxu0 %v40
    %550 = vmatpush1.msra.mxu0 %v39
    %551 = vmatprep.subr.mxu0 %v44
    %552 = vmatpush1.msra.mxu0 %v43
    %553 = vmatprep.subr.mxu0 %v48
    %554 = vmatpush1.msra.mxu0 %v47
    %555 = vmatprep.subr.mxu0 %v52
    %556 = vmatpush1.msra.mxu0 %v51
    %557 = vmatprep.subr.mxu0 %v56
    %558 = vmatpush1.msra.mxu0 %v55
    %559 = vmatprep.subr.mxu0 %v60
    %560 = vmatpush1.msra.mxu0 %v59
    %561 = vmatprep.subr.mxu0 %v64
    %562 = vmatpush1.msra.mxu0 %v63
    %563 = vmatprep.subr.mxu0 %v68
    %564 = vmatpush1.msra.mxu0 %v67
    %565 = vmatprep.subr.mxu0 %v72
    %566 = vmatpush1.msra.mxu0 %v71
    %567 = vmatprep.subr.mxu0 %v76
    %568 = vmatpush1.msra.mxu0 %v75
    %569 = vmatprep.subr.mxu0 %v80
    %570 = vmatpush1.msra.mxu0 %v79
    %571 = vmatprep.subr.mxu0 %v84
    %572 = vmatpush1.msra.mxu0 %v83
    %573 = vmatprep.subr.mxu0 %v88
    %574 = vmatpush1.msra.mxu0 %v87
    %575 = vmatprep.subr.mxu0 %v92
    %576 = vmatpush1.msra.mxu0 %v91
    %577 = vmatprep.subr.mxu0 %v96
    %578 = vmatpush1.msra.mxu0 %v95
    %579 = vmatprep.subr.mxu0 %v100
    %580 = vmatpush1.msra.mxu0 %v99
    %581 = vmatprep.subr.mxu0 %v104
    %582 = vmatpush1.msra.mxu0 %v103
    %583 = vmatprep.subr.mxu0 %v108
    %584 = vmatpush1.msra.mxu0 %v107
    %585 = vmatprep.subr.mxu0 %v112
    %586 = vmatpush1.msra.mxu0 %v111
    %587 = vmatprep.subr.mxu0 %v116
    %588 = vmatpush1.msra.mxu0 %v115
    %589 = vmatprep.subr.mxu0 %v120
    %590 = vmatpush1.msra.mxu0 %v119
    %591 = vmatprep.subr.mxu0 %v124
    %592 = vmatpush1.msra.mxu0 %v123
    %593 = vmatprep.subr.mxu0 %v128
    %594 = vmatpush1.msra.mxu0 %v127
    %595 = vmatprep.subr.mxu0 %v132
    %596 = vmatpush1.msra.mxu0 %v131
    %597 = vmatprep.subr.mxu0 %v136
    %598 = vmatpush1.msra.mxu0 %v135
    %599 = vmatprep.subr.mxu0 %v140
    %600 = vmatpush1.msra.mxu0 %v139
    %601 = vmatprep.subr.mxu0 %v144
    %602 = vmatpush1.msra.mxu0 %v143
    %603 = vmatprep.subr.mxu0 %v148
    %604 = vmatpush1.msra.mxu0 %v147
    %605 = vmatprep.subr.mxu0 %v152
    %606 = vmatpush1.msra.mxu0 %v151
    %607 = vmatprep.subr.mxu0 %v156
    %608 = vmatpush1.msra.mxu0 %v155
    %609 = vmatprep.subr.mxu0 %v160
    %610 = vmatpush1.msra.mxu0 %v159
    %611 = vmatprep.mubr.f32.mxu0 %v28
    %612 = vmatmul.mubr.f32.gmra.mrb[0].mxu0 %v27
    %v613 = vpop.f32.mrb[0].mxu0
    %v614 = vadd.f32 0.0, %v613
    %v615 = vpop.f32.mrb[0].mxu0
    %v616 = vadd.f32 0.0, %v615
    %617 = vdwg.mxu0
    %618 = vmatprep.subr.mxu0 %v164
    %619 = vmatpush1.msra.mxu0 %v163
    %620 = vmatprep.subr.mxu0 %v168
    %621 = vmatpush1.msra.mxu0 %v167
    %622 = vmatprep.subr.mxu0 %v172
    %623 = vmatpush1.msra.mxu0 %v171
    %624 = vmatprep.subr.mxu0 %v176
    %625 = vmatpush1.msra.mxu0 %v175
    %626 = vmatprep.subr.mxu0 %v180
    %627 = vmatpush1.msra.mxu0 %v179
    %628 = vmatprep.subr.mxu0 %v184
    %629 = vmatpush1.msra.mxu0 %v183
    %630 = vmatprep.subr.mxu0 %v188
    %631 = vmatpush1.msra.mxu0 %v187
    %632 = vmatprep.subr.mxu0 %v192
    %633 = vmatpush1.msra.mxu0 %v191
    %634 = vmatprep.subr.mxu0 %v196
    %635 = vmatpush1.msra.mxu0 %v195
    %636 = vmatprep.subr.mxu0 %v200
    %637 = vmatpush1.msra.mxu0 %v199
    %638 = vmatprep.subr.mxu0 %v204
    %639 = vmatpush1.msra.mxu0 %v203
    %640 = vmatprep.subr.mxu0 %v208
    %641 = vmatpush1.msra.mxu0 %v207
    %642 = vmatprep.subr.mxu0 %v212
    %643 = vmatpush1.msra.mxu0 %v211
    %644 = vmatprep.subr.mxu0 %v216
    %645 = vmatpush1.msra.mxu0 %v215
    %646 = vmatprep.subr.mxu0 %v220
    %647 = vmatpush1.msra.mxu0 %v219
    %648 = vmatprep.subr.mxu0 %v224
    %649 = vmatpush1.msra.mxu0 %v223
    %650 = vmatprep.subr.mxu0 %v228
    %651 = vmatpush1.msra.mxu0 %v227
    %652 = vmatprep.subr.mxu0 %v232
    %653 = vmatpush1.msra.mxu0 %v231
    %654 = vmatprep.subr.mxu0 %v236
    %655 = vmatpush1.msra.mxu0 %v235
    %656 = vmatprep.subr.mxu0 %v240
    %657 = vmatpush1.msra.mxu0 %v239
    %658 = vmatprep.subr.mxu0 %v244
    %659 = vmatpush1.msra.mxu0 %v243
    %660 = vmatprep.subr.mxu0 %v248
    %661 = vmatpush1.msra.mxu0 %v247
    %662 = vmatprep.subr.mxu0 %v252
    %663 = vmatpush1.msra.mxu0 %v251
    %664 = vmatprep.subr.mxu0 %v256
    %665 = vmatpush1.msra.mxu0 %v255
    %666 = vmatprep.subr.mxu0 %v260
    %667 = vmatpush1.msra.mxu0 %v259
    %668 = vmatprep.subr.mxu0 %v264
    %669 = vmatpush1.msra.mxu0 %v263
    %670 = vmatprep.subr.mxu0 %v268
    %671 = vmatpush1.msra.mxu0 %v267
    %672 = vmatprep.subr.mxu0 %v272
    %673 = vmatpush1.msra.mxu0 %v271
    %674 = vmatprep.subr.mxu0 %v276
    %675 = vmatpush1.msra.mxu0 %v275
    %676 = vmatprep.subr.mxu0 %v280
    %677 = vmatpush1.msra.mxu0 %v279
    %678 = vmatprep.subr.mxu0 %v284
    %679 = vmatpush1.msra.mxu0 %v283
    %680 = vmatprep.subr.mxu0 %v288
    %681 = vmatpush1.msra.mxu0 %v287
    %682 = vmatprep.mubr.f32.mxu0 %v30
    %683 = vmatmul.mubr.f32.gmra.mrb[0].mxu0 %v29
    %v684 = vpop.f32.mrb[0].mxu0
    %v685 = vadd.f32 %v614, %v684
    %v686 = vpop.f32.mrb[0].mxu0
    %v687 = vadd.f32 %v616, %v686
    %688 = vdwg.mxu0
    %689 = vmatprep.subr.mxu0 %v292
    %690 = vmatpush1.msra.mxu0 %v291
    %691 = vmatprep.subr.mxu0 %v296
    %692 = vmatpush1.msra.mxu0 %v295
    %693 = vmatprep.subr.mxu0 %v300
    %694 = vmatpush1.msra.mxu0 %v299
    %695 = vmatprep.subr.mxu0 %v304
    %696 = vmatpush1.msra.mxu0 %v303
    %697 = vmatprep.subr.mxu0 %v308
    %698 = vmatpush1.msra.mxu0 %v307
    %699 = vmatprep.subr.mxu0 %v312
    %700 = vmatpush1.msra.mxu0 %v311
    %701 = vmatprep.subr.mxu0 %v316
    %702 = vmatpush1.msra.mxu0 %v315
    %703 = vmatprep.subr.mxu0 %v320
    %704 = vmatpush1.msra.mxu0 %v319
    %705 = vmatprep.subr.mxu0 %v324
    %706 = vmatpush1.msra.mxu0 %v323
    %707 = vmatprep.subr.mxu0 %v328
    %708 = vmatpush1.msra.mxu0 %v327
    %709 = vmatprep.subr.mxu0 %v332
    %710 = vmatpush1.msra.mxu0 %v331
    %711 = vmatprep.subr.mxu0 %v336
    %712 = vmatpush1.msra.mxu0 %v335
    %713 = vmatprep.subr.mxu0 %v340
    %714 = vmatpush1.msra.mxu0 %v339
    %715 = vmatprep.subr.mxu0 %v344
    %716 = vmatpush1.msra.mxu0 %v343
    %717 = vmatprep.subr.mxu0 %v348
    %718 = vmatpush1.msra.mxu0 %v347
    %719 = vmatprep.subr.mxu0 %v352
    %720 = vmatpush1.msra.mxu0 %v351
    %721 = vmatprep.subr.mxu0 %v356
    %722 = vmatpush1.msra.mxu0 %v355
    %723 = vmatprep.subr.mxu0 %v360
    %724 = vmatpush1.msra.mxu0 %v359
    %725 = vmatprep.subr.mxu0 %v364
    %726 = vmatpush1.msra.mxu0 %v363
    %727 = vmatprep.subr.mxu0 %v368
    %728 = vmatpush1.msra.mxu0 %v367
    %729 = vmatprep.subr.mxu0 %v372
    %730 = vmatpush1.msra.mxu0 %v371
    %731 = vmatprep.subr.mxu0 %v376
    %732 = vmatpush1.msra.mxu0 %v375
    %733 = vmatprep.subr.mxu0 %v380
    %734 = vmatpush1.msra.mxu0 %v379
    %735 = vmatprep.subr.mxu0 %v384
    %736 = vmatpush1.msra.mxu0 %v383
    %737 = vmatprep.subr.mxu0 %v388
    %738 = vmatpush1.msra.mxu0 %v387
    %739 = vmatprep.subr.mxu0 %v392
    %740 = vmatpush1.msra.mxu0 %v391
    %741 = vmatprep.subr.mxu0 %v396
    %742 = vmatpush1.msra.mxu0 %v395
    %743 = vmatprep.subr.mxu0 %v400
    %744 = vmatpush1.msra.mxu0 %v399
    %745 = vmatprep.subr.mxu0 %v404
    %746 = vmatpush1.msra.mxu0 %v403
    %747 = vmatprep.subr.mxu0 %v408
    %748 = vmatpush1.msra.mxu0 %v407
    %749 = vmatprep.subr.mxu0 %v412
    %750 = vmatpush1.msra.mxu0 %v411
    %751 = vmatprep.subr.mxu0 %v416
    %752 = vmatpush1.msra.mxu0 %v415
    %753 = vmatprep.mubr.f32.mxu0 %v32
    %754 = vmatmul.mubr.f32.gmra.mrb[0].mxu0 %v31
    %v755 = vpop.f32.mrb[0].mxu0
    %v756 = vadd.f32 %v685, %v755
    %v757 = vpop.f32.mrb[0].mxu0
    %v758 = vadd.f32 %v687, %v757
    %759 = vdwg.mxu0
    %760 = vmatprep.subr.mxu0 %v420
    %761 = vmatpush1.msra.mxu0 %v419
    %762 = vmatprep.subr.mxu0 %v424
    %763 = vmatpush1.msra.mxu0 %v423
    %764 = vmatprep.subr.mxu0 %v428
    %765 = vmatpush1.msra.mxu0 %v427
    %766 = vmatprep.subr.mxu0 %v432
    %767 = vmatpush1.msra.mxu0 %v431
    %768 = vmatprep.subr.mxu0 %v436
    %769 = vmatpush1.msra.mxu0 %v435
    %770 = vmatprep.subr.mxu0 %v440
    %771 = vmatpush1.msra.mxu0 %v439
    %772 = vmatprep.subr.mxu0 %v444
    %773 = vmatpush1.msra.mxu0 %v443
    %774 = vmatprep.subr.mxu0 %v448
    %775 = vmatpush1.msra.mxu0 %v447
    %776 = vmatprep.subr.mxu0 %v452
    %777 = vmatpush1.msra.mxu0 %v451
    %778 = vmatprep.subr.mxu0 %v456
    %779 = vmatpush1.msra.mxu0 %v455
    %780 = vmatprep.subr.mxu0 %v460
    %781 = vmatpush1.msra.mxu0 %v459
    %782 = vmatprep.subr.mxu0 %v464
    %783 = vmatpush1.msra.mxu0 %v463
    %784 = vmatprep.subr.mxu0 %v468
    %785 = vmatpush1.msra.mxu0 %v467
    %786 = vmatprep.subr.mxu0 %v472
    %787 = vmatpush1.msra.mxu0 %v471
    %788 = vmatprep.subr.mxu0 %v476
    %789 = vmatpush1.msra.mxu0 %v475
    %790 = vmatprep.subr.mxu0 %v480
    %791 = vmatpush1.msra.mxu0 %v479
    %792 = vmatprep.subr.mxu0 %v484
    %793 = vmatpush1.msra.mxu0 %v483
    %794 = vmatprep.subr.mxu0 %v488
    %795 = vmatpush1.msra.mxu0 %v487
    %796 = vmatprep.subr.mxu0 %v492
    %797 = vmatpush1.msra.mxu0 %v491
    %798 = vmatprep.subr.mxu0 %v496
    %799 = vmatpush1.msra.mxu0 %v495
    %800 = vmatprep.subr.mxu0 %v500
    %801 = vmatpush1.msra.mxu0 %v499
    %802 = vmatprep.subr.mxu0 %v504
    %803 = vmatpush1.msra.mxu0 %v503
    %804 = vmatprep.subr.mxu0 %v508
    %805 = vmatpush1.msra.mxu0 %v507
    %806 = vmatprep.subr.mxu0 %v512
    %807 = vmatpush1.msra.mxu0 %v511
    %808 = vmatprep.subr.mxu0 %v516
    %809 = vmatpush1.msra.mxu0 %v515
    %810 = vmatprep.subr.mxu0 %v520
    %811 = vmatpush1.msra.mxu0 %v519
    %812 = vmatprep.subr.mxu0 %v524
    %813 = vmatpush1.msra.mxu0 %v523
    %814 = vmatprep.subr.mxu0 %v528
    %815 = vmatpush1.msra.mxu0 %v527
    %816 = vmatprep.subr.mxu0 %v532
    %817 = vmatpush1.msra.mxu0 %v531
    %818 = vmatprep.subr.mxu0 %v536
    %819 = vmatpush1.msra.mxu0 %v535
    %820 = vmatprep.subr.mxu0 %v540
    %821 = vmatpush1.msra.mxu0 %v539
    %822 = vmatprep.subr.mxu0 %v544
    %823 = vmatpush1.msra.mxu0 %v543
    %824 = vmatprep.mubr.f32.mxu0 %v34
    %825 = vmatmul.mubr.f32.gmra.mrb[0].mxu0 %v33
    %v826 = vpop.f32.mrb[0].mxu0
    %v827 = vadd.f32 %v756, %v826
    %v828 = vpop.f32.mrb[0].mxu0
    %v829 = vadd.f32 %v758, %v828
    %830 = vdwg.mxu0
    %831 = vmatprep.subr.mxu0 %v38
    %832 = vmatpush1.msra.mxu0 %v37
    %833 = vmatprep.subr.mxu0 %v42
    %834 = vmatpush1.msra.mxu0 %v41
    %835 = vmatprep.subr.mxu0 %v46
    %836 = vmatpush1.msra.mxu0 %v45
    %837 = vmatprep.subr.mxu0 %v50
    %838 = vmatpush1.msra.mxu0 %v49
    %839 = vmatprep.subr.mxu0 %v54
    %840 = vmatpush1.msra.mxu0 %v53
    %841 = vmatprep.subr.mxu0 %v58
    %842 = vmatpush1.msra.mxu0 %v57
    %843 = vmatprep.subr.mxu0 %v62
    %844 = vmatpush1.msra.mxu0 %v61
    %845 = vmatprep.subr.mxu0 %v66
    %846 = vmatpush1.msra.mxu0 %v65
    %847 = vmatprep.subr.mxu0 %v70
    %848 = vmatpush1.msra.mxu0 %v69
    %849 = vmatprep.subr.mxu0 %v74
    %850 = vmatpush1.msra.mxu0 %v73
    %851 = vmatprep.subr.mxu0 %v78
    %852 = vmatpush1.msra.mxu0 %v77
    %853 = vmatprep.subr.mxu0 %v82
    %854 = vmatpush1.msra.mxu0 %v81
    %855 = vmatprep.subr.mxu0 %v86
    %856 = vmatpush1.msra.mxu0 %v85
    %857 = vmatprep.subr.mxu0 %v90
    %858 = vmatpush1.msra.mxu0 %v89
    %859 = vmatprep.subr.mxu0 %v94
    %860 = vmatpush1.msra.mxu0 %v93
    %861 = vmatprep.subr.mxu0 %v98
    %862 = vmatpush1.msra.mxu0 %v97
    %863 = vmatprep.subr.mxu0 %v102
    %864 = vmatpush1.msra.mxu0 %v101
    %865 = vmatprep.subr.mxu0 %v106
    %866 = vmatpush1.msra.mxu0 %v105
    %867 = vmatprep.subr.mxu0 %v110
    %868 = vmatpush1.msra.mxu0 %v109
    %869 = vmatprep.subr.mxu0 %v114
    %870 = vmatpush1.msra.mxu0 %v113
    %871 = vmatprep.subr.mxu0 %v118
    %872 = vmatpush1.msra.mxu0 %v117
    %873 = vmatprep.subr.mxu0 %v122
    %874 = vmatpush1.msra.mxu0 %v121
    %875 = vmatprep.subr.mxu0 %v126
    %876 = vmatpush1.msra.mxu0 %v125
    %877 = vmatprep.subr.mxu0 %v130
    %878 = vmatpush1.msra.mxu0 %v129
    %879 = vmatprep.subr.mxu0 %v134
    %880 = vmatpush1.msra.mxu0 %v133
    %881 = vmatprep.subr.mxu0 %v138
    %882 = vmatpush1.msra.mxu0 %v137
    %883 = vmatprep.subr.mxu0 %v142
    %884 = vmatpush1.msra.mxu0 %v141
    %885 = vmatprep.subr.mxu0 %v146
    %886 = vmatpush1.msra.mxu0 %v145
    %887 = vmatprep.subr.mxu0 %v150
    %888 = vmatpush1.msra.mxu0 %v149
    %889 = vmatprep.subr.mxu0 %v154
    %890 = vmatpush1.msra.mxu0 %v153
    %891 = vmatprep.subr.mxu0 %v158
    %892 = vmatpush1.msra.mxu0 %v157
    %893 = vmatprep.subr.mxu0 %v162
    %894 = vmatpush1.msra.mxu0 %v161
    %895 = vmatprep.mubr.f32.mxu0 %v28
    %896 = vmatmul.mubr.f32.gmra.mrb[0].mxu0 %v27
    %v897 = vpop.f32.mrb[0].mxu0
    %v898 = vadd.f32 0.0, %v897
    %v899 = vpop.f32.mrb[0].mxu0
    %v900 = vadd.f32 0.0, %v899
    %901 = vdwg.mxu0
    %902 = vmatprep.subr.mxu0 %v166
    %903 = vmatpush1.msra.mxu0 %v165
    %904 = vmatprep.subr.mxu0 %v170
    %905 = vmatpush1.msra.mxu0 %v169
    %906 = vmatprep.subr.mxu0 %v174
    %907 = vmatpush1.msra.mxu0 %v173
    %908 = vmatprep.subr.mxu0 %v178
    %909 = vmatpush1.msra.mxu0 %v177
    %910 = vmatprep.subr.mxu0 %v182
    %911 = vmatpush1.msra.mxu0 %v181
    %912 = vmatprep.subr.mxu0 %v186
    %913 = vmatpush1.msra.mxu0 %v185
    %914 = vmatprep.subr.mxu0 %v190
    %915 = vmatpush1.msra.mxu0 %v189
    %916 = vmatprep.subr.mxu0 %v194
    %917 = vmatpush1.msra.mxu0 %v193
    %918 = vmatprep.subr.mxu0 %v198
    %919 = vmatpush1.msra.mxu0 %v197
    %920 = vmatprep.subr.mxu0 %v202
    %921 = vmatpush1.msra.mxu0 %v201
    %922 = vmatprep.subr.mxu0 %v206
    %923 = vmatpush1.msra.mxu0 %v205
    %924 = vmatprep.subr.mxu0 %v210
    %925 = vmatpush1.msra.mxu0 %v209
    %926 = vmatprep.subr.mxu0 %v214
    %927 = vmatpush1.msra.mxu0 %v213
    %928 = vmatprep.subr.mxu0 %v218
    %929 = vmatpush1.msra.mxu0 %v217
    %930 = vmatprep.subr.mxu0 %v222
    %931 = vmatpush1.msra.mxu0 %v221
    %932 = vmatprep.subr.mxu0 %v226
    %933 = vmatpush1.msra.mxu0 %v225
    %934 = vmatprep.subr.mxu0 %v230
    %935 = vmatpush1.msra.mxu0 %v229
    %936 = vmatprep.subr.mxu0 %v234
    %937 = vmatpush1.msra.mxu0 %v233
    %938 = vmatprep.subr.mxu0 %v238
    %939 = vmatpush1.msra.mxu0 %v237
    %940 = vmatprep.subr.mxu0 %v242
    %941 = vmatpush1.msra.mxu0 %v241
    %942 = vmatprep.subr.mxu0 %v246
    %943 = vmatpush1.msra.mxu0 %v245
    %944 = vmatprep.subr.mxu0 %v250
    %945 = vmatpush1.msra.mxu0 %v249
    %946 = vmatprep.subr.mxu0 %v254
    %947 = vmatpush1.msra.mxu0 %v253
    %948 = vmatprep.subr.mxu0 %v258
    %949 = vmatpush1.msra.mxu0 %v257
    %950 = vmatprep.subr.mxu0 %v262
    %951 = vmatpush1.msra.mxu0 %v261
    %952 = vmatprep.subr.mxu0 %v266
    %953 = vmatpush1.msra.mxu0 %v265
    %954 = vmatprep.subr.mxu0 %v270
    %955 = vmatpush1.msra.mxu0 %v269
    %956 = vmatprep.subr.mxu0 %v274
    %957 = vmatpush1.msra.mxu0 %v273
    %958 = vmatprep.subr.mxu0 %v278
    %959 = vmatpush1.msra.mxu0 %v277
    %960 = vmatprep.subr.mxu0 %v282
    %961 = vmatpush1.msra.mxu0 %v281
    %962 = vmatprep.subr.mxu0 %v286
    %963 = vmatpush1.msra.mxu0 %v285
    %964 = vmatprep.subr.mxu0 %v290
    %965 = vmatpush1.msra.mxu0 %v289
    %966 = vmatprep.mubr.f32.mxu0 %v30
    %967 = vmatmul.mubr.f32.gmra.mrb[0].mxu0 %v29
    %v968 = vpop.f32.mrb[0].mxu0
    %v969 = vadd.f32 %v898, %v968
    %v970 = vpop.f32.mrb[0].mxu0
    %v971 = vadd.f32 %v900, %v970
    %972 = vdwg.mxu0
    %973 = vmatprep.subr.mxu0 %v294
    %974 = vmatpush1.msra.mxu0 %v293
    %975 = vmatprep.subr.mxu0 %v298
    %976 = vmatpush1.msra.mxu0 %v297
    %977 = vmatprep.subr.mxu0 %v302
    %978 = vmatpush1.msra.mxu0 %v301
    %979 = vmatprep.subr.mxu0 %v306
    %980 = vmatpush1.msra.mxu0 %v305
    %981 = vmatprep.subr.mxu0 %v310
    %982 = vmatpush1.msra.mxu0 %v309
    %983 = vmatprep.subr.mxu0 %v314
    %984 = vmatpush1.msra.mxu0 %v313
    %985 = vmatprep.subr.mxu0 %v318
    %986 = vmatpush1.msra.mxu0 %v317
    %987 = vmatprep.subr.mxu0 %v322
    %988 = vmatpush1.msra.mxu0 %v321
    %989 = vmatprep.subr.mxu0 %v326
    %990 = vmatpush1.msra.mxu0 %v325
    %991 = vmatprep.subr.mxu0 %v330
    %992 = vmatpush1.msra.mxu0 %v329
    %993 = vmatprep.subr.mxu0 %v334
    %994 = vmatpush1.msra.mxu0 %v333
    %995 = vmatprep.subr.mxu0 %v338
    %996 = vmatpush1.msra.mxu0 %v337
    %997 = vmatprep.subr.mxu0 %v342
    %998 = vmatpush1.msra.mxu0 %v341
    %999 = vmatprep.subr.mxu0 %v346
    %1000 = vmatpush1.msra.mxu0 %v345
    %1001 = vmatprep.subr.mxu0 %v350
    %1002 = vmatpush1.msra.mxu0 %v349
    %1003 = vmatprep.subr.mxu0 %v354
    %1004 = vmatpush1.msra.mxu0 %v353
    %1005 = vmatprep.subr.mxu0 %v358
    %1006 = vmatpush1.msra.mxu0 %v357
    %1007 = vmatprep.subr.mxu0 %v362
    %1008 = vmatpush1.msra.mxu0 %v361
    %1009 = vmatprep.subr.mxu0 %v366
    %1010 = vmatpush1.msra.mxu0 %v365
    %1011 = vmatprep.subr.mxu0 %v370
    %1012 = vmatpush1.msra.mxu0 %v369
    %1013 = vmatprep.subr.mxu0 %v374
    %1014 = vmatpush1.msra.mxu0 %v373
    %1015 = vmatprep.subr.mxu0 %v378
    %1016 = vmatpush1.msra.mxu0 %v377
    %1017 = vmatprep.subr.mxu0 %v382
    %1018 = vmatpush1.msra.mxu0 %v381
    %1019 = vmatprep.subr.mxu0 %v386
    %1020 = vmatpush1.msra.mxu0 %v385
    %1021 = vmatprep.subr.mxu0 %v390
    %1022 = vmatpush1.msra.mxu0 %v389
    %1023 = vmatprep.subr.mxu0 %v394
    %1024 = vmatpush1.msra.mxu0 %v393
    %1025 = vmatprep.subr.mxu0 %v398
    %1026 = vmatpush1.msra.mxu0 %v397
    %1027 = vmatprep.subr.mxu0 %v402
    %1028 = vmatpush1.msra.mxu0 %v401
    %1029 = vmatprep.subr.mxu0 %v406
    %1030 = vmatpush1.msra.mxu0 %v405
    %1031 = vmatprep.subr.mxu0 %v410
    %1032 = vmatpush1.msra.mxu0 %v409
    %1033 = vmatprep.subr.mxu0 %v414
    %1034 = vmatpush1.msra.mxu0 %v413
    %1035 = vmatprep.subr.mxu0 %v418
    %1036 = vmatpush1.msra.mxu0 %v417
    %1037 = vmatprep.mubr.f32.mxu0 %v32
    %1038 = vmatmul.mubr.f32.gmra.mrb[0].mxu0 %v31
    %v1039 = vpop.f32.mrb[0].mxu0
    %v1040 = vadd.f32 %v969, %v1039
    %v1041 = vpop.f32.mrb[0].mxu0
    %v1042 = vadd.f32 %v971, %v1041
    %1043 = vdwg.mxu0
    %1044 = vmatprep.subr.mxu0 %v422
    %1045 = vmatpush1.msra.mxu0 %v421
    %1046 = vmatprep.subr.mxu0 %v426
    %1047 = vmatpush1.msra.mxu0 %v425
    %1048 = vmatprep.subr.mxu0 %v430
    %1049 = vmatpush1.msra.mxu0 %v429
    %1050 = vmatprep.subr.mxu0 %v434
    %1051 = vmatpush1.msra.mxu0 %v433
    %1052 = vmatprep.subr.mxu0 %v438
    %1053 = vmatpush1.msra.mxu0 %v437
    %1054 = vmatprep.subr.mxu0 %v442
    %1055 = vmatpush1.msra.mxu0 %v441
    %1056 = vmatprep.subr.mxu0 %v446
    %1057 = vmatpush1.msra.mxu0 %v445
    %1058 = vmatprep.subr.mxu0 %v450
    %1059 = vmatpush1.msra.mxu0 %v449
    %1060 = vmatprep.subr.mxu0 %v454
    %1061 = vmatpush1.msra.mxu0 %v453
    %1062 = vmatprep.subr.mxu0 %v458
    %1063 = vmatpush1.msra.mxu0 %v457
    %1064 = vmatprep.subr.mxu0 %v462
    %1065 = vmatpush1.msra.mxu0 %v461
    %1066 = vmatprep.subr.mxu0 %v466
    %1067 = vmatpush1.msra.mxu0 %v465
    %1068 = vmatprep.subr.mxu0 %v470
    %1069 = vmatpush1.msra.mxu0 %v469
    %1070 = vmatprep.subr.mxu0 %v474
    %1071 = vmatpush1.msra.mxu0 %v473
    %1072 = vmatprep.subr.mxu0 %v478
    %1073 = vmatpush1.msra.mxu0 %v477
    %1074 = vmatprep.subr.mxu0 %v482
    %1075 = vmatpush1.msra.mxu0 %v481
    %1076 = vmatprep.subr.mxu0 %v486
    %1077 = vmatpush1.msra.mxu0 %v485
    %1078 = vmatprep.subr.mxu0 %v490
    %1079 = vmatpush1.msra.mxu0 %v489
    %1080 = vmatprep.subr.mxu0 %v494
    %1081 = vmatpush1.msra.mxu0 %v493
    %1082 = vmatprep.subr.mxu0 %v498
    %1083 = vmatpush1.msra.mxu0 %v497
    %1084 = vmatprep.subr.mxu0 %v502
    %1085 = vmatpush1.msra.mxu0 %v501
    %1086 = vmatprep.subr.mxu0 %v506
    %1087 = vmatpush1.msra.mxu0 %v505
    %1088 = vmatprep.subr.mxu0 %v510
    %1089 = vmatpush1.msra.mxu0 %v509
    %1090 = vmatprep.subr.mxu0 %v514
    %1091 = vmatpush1.msra.mxu0 %v513
    %1092 = vmatprep.subr.mxu0 %v518
    %1093 = vmatpush1.msra.mxu0 %v517
    %1094 = vmatprep.subr.mxu0 %v522
    %1095 = vmatpush1.msra.mxu0 %v521
    %1096 = vmatprep.subr.mxu0 %v526
    %1097 = vmatpush1.msra.mxu0 %v525
    %1098 = vmatprep.subr.mxu0 %v530
    %1099 = vmatpush1.msra.mxu0 %v529
    %1100 = vmatprep.subr.mxu0 %v534
    %1101 = vmatpush1.msra.mxu0 %v533
    %1102 = vmatprep.subr.mxu0 %v538
    %1103 = vmatpush1.msra.mxu0 %v537
    %1104 = vmatprep.subr.mxu0 %v542
    %1105 = vmatpush1.msra.mxu0 %v541
    %1106 = vmatprep.subr.mxu0 %v546
    %1107 = vmatpush1.msra.mxu0 %v545
    %1108 = vmatprep.mubr.f32.mxu0 %v34
    %1109 = vmatmul.mubr.f32.gmra.mrb[0].mxu0 %v33
    %v1110 = vpop.f32.mrb[0].mxu0
    %v1111 = vadd.f32 %v1040, %v1110
    %v1112 = vpop.f32.mrb[0].mxu0
    %v1113 = vadd.f32 %v1042, %v1112
    %1114 = vdwg.mxu0
    %s1115 = sld [smem:[#allocation2]]
    %v1116 = vstv %s1115
    %v1117 = vadd.f32 %v827, %v1116
    %v1118 = vxor.u32 %v1117, 2147483648
    %v1119 = vmul.f32 %v1118, 1.442695
    %v1120 = vpow.pop %v1119
    %v1121 = vadd.f32 %v1120, 1.0
    %v1122 = vrcp.pop %v1121
    %v1123 = vmul.f32 1.0, %v1122
    %s1124 = sld [smem:[#allocation2 + $0x1]]
    %v1125 = vstv %s1124
    %v1126 = vadd.f32 %v829, %v1125
    %v1127 = vxor.u32 %v1126, 2147483648
    %v1128 = vmul.f32 %v1127, 1.442695
    %v1129 = vpow.pop %v1128
    %v1130 = vadd.f32 %v1129, 1.0
    %v1131 = vrcp.pop %v1130
    %v1132 = vmul.f32 1.0, %v1131
    %s1133 = sld [smem:[#allocation2 + $0x2]]
    %v1134 = vstv %s1133
    %v1135 = vadd.f32 %v1111, %v1134
    %s1136 = sld [smem:[#allocation2 + $0x4]]
    %v1137 = vstv %s1136
    %v1138 = vmul.f32 %v1113, %v1137
    %s1139 = sld [smem:[#allocation2 + $0x3]]
    %v1140 = vstv %s1139
    %v1141 = vadd.f32 %v1138, %v1140
    %v1142 = vmul.f32 %v1123, %v1141
    %v1143 = vadd.f32 %v1135, %v1142
    %v1144 = vtanh.pop %v1143
    %v1145 = vsub.f32 1.0, %v1132
    %v1146 = vmul.f32 %v1145, %v1144
    %v1147 = vmul.f32 %v1132, %v1113
    %v1148 = vadd.f32 %v1146, %v1147
    %s1149 = sld [smem:[#allocation2 + $0x5]]
    %v1150 = vstv %s1149
    %v1151 = vmul.f32 %v1148, %v1150
    %s1152 = sld [smem:[#allocation2 + $0x6]]
    %v1153 = vstv %s1152
    %v1154 = vadd.f32 %v1151, %v1153
    %1155 = vst [vmem:[%s3] sm:$0xff] %v1154
    // Predicated region
    $region18: #{gru_module_forward.1} parent=1 // pred_check
      _
    $region19: #{gru_module_forward.1} parent=1 // pred_check_branch
      %1157 = sbr.rel (0) target = $region21
    $region20: #{gru_module_forward.1} parent=1 // pred_region
      _
    $region21: #{gru_module_forward.1} parent=1 // pred_fallthru
      _
    // Predicated region
    $region22: #{gru_module_forward.1} parent=1 // pred_check
      _
    $region23: #{gru_module_forward.1} parent=1 // pred_check_branch
      %1159 = sbr.rel (0) target = $region25
    $region24: #{gru_module_forward.1} parent=1 // pred_region
      _
    $region25: #{gru_module_forward.1} parent=1 // pred_fallthru
      _
    %1160 = vsyncpa [#allocation3], 1

</llo_original>
